<compile_context>
chip_gen: v7x
topology: tpu7x:2x2x1
jax: 0.10.0
libtpu: 0.0.40
codegen_flags: <defaults>
</compile_context>

<pallas_src>
import functools
import math

import jax
import jax.numpy as jnp
from jax import lax
from jax.experimental import pallas as pl
from jax.experimental.pallas import tpu as pltpu

_LANE = 128
_MiB = 1 << 20
_HEADROOM = 6 * _MiB          # slack inside vmem_limit for compiler-internal scratch


def _round_up(x, m):
    return ((x + m - 1) // m) * m


def _sublane_multiple(*dtypes):
    """Sub-32-bit dtypes pack along sublanes: keep tm a multiple of the packed count."""
    min_isz = min(jnp.dtype(d).itemsize for d in dtypes)
    if min_isz >= 4:
        return 8
    if min_isz == 2:
        return 16
    return 32


@functools.lru_cache(maxsize=1)
def _vmem_budget_and_target():
    """(max VMEM bytes we request, target REAL input bytes per block per operand)."""
    try:
        cap = int(pltpu.get_tpu_info().vmem_capacity_bytes)
    except Exception:
        cap = 64 * _MiB                                   # conservative: v7x per-TC VMEM
    if cap <= 80 * _MiB:                                  # v7x-class (64 MiB per TensorCore)
        return min(cap * 3 // 4, 48 * _MiB), 10 * _MiB
    return min(cap * 3 // 4, 96 * _MiB), 12 * _MiB        # v5e / v6e (128 MiB VMEM)


def _plan_blocks(M, D, isz_p, isz_l, sub, *, row_output):
    """Pick (tm, td, vmem_limit_bytes).

    row_output=True  -> row-loss kernel ((tm, 1) output, may tile D on a 2nd grid axis).
    row_output=False -> fused partial-sum kernel (needs the full feature dim in one
                        block); returns None if that does not fit so the caller falls
                        back to the row kernel.
    """
    M, D = max(int(M), 1), max(int(D), 1)
    budget, target_real = _vmem_budget_and_target()
    usable = budget - _HEADROOM
    isz_in = isz_p + isz_l                                # both operands, per element
    d_pad = _round_up(D, _LANE)

    out_per_row = 2 * _LANE * 4 if row_output else 0      # (tm,1) f32 lane-padded, double-buffered
    out_fixed = 0 if row_output else 2 * 8 * _LANE * 4    # (1,8,128) f32 partials, double-buffered
    per_row = 2 * d_pad * isz_in + out_per_row            # 2 VMEM buffers per operand

    min_rows = M if M < sub else sub
    if (usable - out_fixed) >= min_rows * per_row:
        td = D
        if M <= sub:
            tm = M                                         # full-rows block (== array dim)
        else:
            tm_vmem = ((usable - out_fixed) // per_row // sub) * sub
            # Budget the block on REAL bytes moved (not lane-padded bytes) so the
            # ~0.35us per-grid-step overhead stays a few % of the HBM roofline ...
            tm_target = _round_up(-(-2 * target_real // (D * isz_in)), sub)
            # ... but keep >= ~4 row blocks when M allows (pipeline overlap, v7x megacore).
            tm_split = _round_up(-(-M // 4), sub)
            tm = max(sub, min(tm_vmem, tm_target, tm_split, (M // sub) * sub))
    elif row_output:
        # Feature dim too wide for one block: tile D on a second ("arbitrary") grid axis
        # and accumulate per-row partial sums into the resident (tm, 1) output block.
        tm = M if M < sub else max(sub, min((M // sub) * sub, _round_up(512, sub)))
        td = ((usable - out_per_row * tm) // (2 * tm * isz_in) // _LANE) * _LANE
        td = max(_LANE, min(td, d_pad))
    else:
        return None

    footprint = 2 * tm * _round_up(td, _LANE) * isz_in + out_per_row * tm + out_fixed
    vmem_limit = int(min(budget, max(32 * _MiB, footprint + _HEADROOM)))
    return int(tm), int(td), vmem_limit


# --------------------------- kernel 1: per-row losses ---------------------------

def _row_sse_kernel(pred_ref, label_ref, out_ref, *, td, d_total, col_mask):
    j = pl.program_id(1)

    @pl.when(j == 0)
    def _init():
        out_ref[...] = jnp.zeros_like(out_ref)

    diff = pred_ref[...].astype(jnp.float32) - label_ref[...].astype(jnp.float32)
    sq = diff * diff
    if col_mask:                                  # ragged last feature tile: mask OOB lanes
        col = lax.broadcasted_iota(jnp.int32, (1, td), 1) + j * td
        sq = jnp.where(col < d_total, sq, 0.0)
    out_ref[...] += jnp.sum(sq, axis=-1, keepdims=True)


@functools.partial(jax.jit, static_argnames=("tm", "td", "vmem_limit"))
def _l2_row_losses(pred2d, label2d, *, tm, td, vmem_limit):
    """(M, D) x2 -> per-row sum of squared error, (M,) f32."""
    M, D = pred2d.shape
    grid = (pl.cdiv(M, tm), pl.cdiv(D, td))
    kernel = functools.partial(_row_sse_kernel, td=td, d_total=D, col_mask=(D % td != 0))
    rowloss = pl.pallas_call(
        kernel,
        out_shape=jax.ShapeDtypeStruct((M, 1), jnp.float32),
        grid=grid,
        in_specs=[
            pl.BlockSpec((tm, td), lambda i, j: (i, j)),
            pl.BlockSpec((tm, td), lambda i, j: (i, j)),
        ],
        out_specs=pl.BlockSpec((tm, 1), lambda i, j: (i, 0)),
        compiler_params=pltpu.CompilerParams(
            dimension_semantics=("parallel", "arbitrary"),
            vmem_limit_bytes=vmem_limit,
        ),
    )(pred2d, label2d)
    return rowloss[:, 0]


# --------------------- kernel 2: fused global SSE partial sums -------------------

def _fused_sse_kernel(pred_ref, label_ref, out_ref, *, tm, m_total, row_mask):
    diff = pred_ref[...].astype(jnp.float32) - label_ref[...].astype(jnp.float32)
    sq = diff * diff
    if row_mask:                                  # ragged last row block: mask OOB rows
        row = lax.broadcasted_iota(jnp.int32, (tm, 1), 0) + pl.program_id(0) * tm
        sq = jnp.where(row < m_total, sq, 0.0)
    s = jnp.sum(sq)
    subl = lax.broadcasted_iota(jnp.int32, (1, 8, _LANE), 1)
    lane = lax.broadcasted_iota(jnp.int32, (1, 8, _LANE), 2)
    out_ref[...] = jnp.where((subl == 0) & (lane == 0), s, 0.0)


@functools.partial(jax.jit, static_argnames=("tm", "vmem_limit"))
def _l2_total_sse(pred2d, label2d, *, tm, vmem_limit):
    """(M, D) x2 -> scalar sum over ALL elements of (pred-label)^2, f32."""
    M, D = pred2d.shape
    gm = pl.cdiv(M, tm)
    kernel = functools.partial(_fused_sse_kernel, tm=tm, m_total=M, row_mask=(M % tm != 0))
    partials = pl.pallas_call(
        kernel,
        out_shape=jax.ShapeDtypeStruct((gm, 8, _LANE), jnp.float32),
        grid=(gm,),
        in_specs=[
            pl.BlockSpec((tm, D), lambda i: (i, 0)),
            pl.BlockSpec((tm, D), lambda i: (i, 0)),
        ],
        out_specs=pl.BlockSpec((1, 8, _LANE), lambda i: (i, 0, 0)),
        compiler_params=pltpu.CompilerParams(
            dimension_semantics=("parallel",),
            vmem_limit_bytes=vmem_limit,
        ),
    )(pred2d, label2d)
    return jnp.sum(partials)


# --------------------------------- module wrapper ---------------------------------

class L2Loss:
    """JAX/Pallas re-implementation of layersnet L2Loss forward semantics."""

    def __init__(self, reduction="mean", loss_weight=1.0, loss_name="loss_l2",
                 obj_wise=True):
        self.reduction = reduction
        self.loss_weight = loss_weight
        self.obj_wise = obj_wise
        self._loss_name = loss_name

    @property
    def loss_name(self):
        return self._loss_name

    def __call__(self, cls_score, label, weight=None, avg_factor=None,
                 reduction_override=None, indices_weight=None):
        assert reduction_override in (None, "none", "mean", "sum")
        reduction = reduction_override if reduction_override else self.reduction

        lead_shape = cls_score.shape[:-1]
        D = int(cls_score.shape[-1])
        M = 1
        for s in lead_shape:
            M *= int(s)
        pred2d = cls_score.reshape(M, D)             # native dtype: no wrapper-side f32 cast
        label2d = label.reshape(M, D)

        isz_p = jnp.dtype(pred2d.dtype).itemsize
        isz_l = jnp.dtype(label2d.dtype).itemsize
        sub = _sublane_multiple(pred2d.dtype, label2d.dtype)

        # ---- hot path: scalar reduction with no element weights -> fused SSE kernel ----
        if (reduction in ("mean", "sum") and weight is None and indices_weight is None
                and M > 0 and D > 0):
            M2, D2 = M, D
            if D % _LANE != 0:
                # Lane-dense repack (free reshape): the fused path only needs the global
                # sum, so regrouping g rows per kernel row is semantics-preserving.
                g = _LANE // math.gcd(D, _LANE)
                if g > 1 and M % g == 0:
                    M2, D2 = M // g, D * g
            plan = _plan_blocks(M2, D2, isz_p, isz_l, sub, row_output=False)
            if plan is not None:
                tm, _td, vmem_limit = plan
                total = _l2_total_sse(pred2d.reshape(M2, D2), label2d.reshape(M2, D2),
                                      tm=tm, vmem_limit=vmem_limit)
                if reduction == "mean":
                    denom = avg_factor if avg_factor is not None else M
                    return (total / denom) * self.loss_weight
                if avg_factor is not None:
                    raise ValueError("avg_factor can not be used with reduction='sum'")
                return total * self.loss_weight
            # else: feature dim too wide for a single block -> row kernel below (tiles D).

        # ---- general path: per-row losses (needed for 'none' and element weights) ----
        tm, td, vmem_limit = _plan_blocks(M, D, isz_p, isz_l, sub, row_output=True)
        row_loss = _l2_row_losses(pred2d, label2d, tm=tm, td=td, vmem_limit=vmem_limit)
        loss = row_loss.reshape(lead_shape)           # == torch.sum(mse, dim=-1)

        if indices_weight is not None:
            iw = indices_weight
            if iw.ndim > 2:
                iw = jnp.squeeze(iw, axis=1)
            if not self.obj_wise:
                iw = (iw > 0).astype(loss.dtype)
                # TODO(synk): an all-zero row yields NaN here (matches the torch code).
                iw = iw / jnp.sum(iw, axis=-1, keepdims=True)
            loss = loss * iw

        if weight is not None:
            loss = loss * weight.astype(jnp.float32)

        if avg_factor is None:
            if reduction == "mean":
                out = jnp.mean(loss)
            elif reduction == "sum":
                out = jnp.sum(loss)
            else:                                     # 'none'
                out = loss
        else:
            if reduction == "mean":
                out = jnp.sum(loss) / avg_factor
            elif reduction == "none":
                out = loss
            else:
                raise ValueError("avg_factor can not be used with reduction='sum'")

        return out * self.loss_weight


if __name__ == "__main__":
    key = jax.random.PRNGKey(0)
    k1, k2, k3, k4, k5 = jax.random.split(key, 5)

    # --- primary shapes: (batch=2, seq=8, hidden=32), f32 ---
    B, N, D = 2, 8, 32
    pred = jax.random.normal(k1, (B, N, D), dtype=jnp.float32)
    label = jax.random.normal(k2, (B, N, D), dtype=jnp.float32)
    loss_mod = L2Loss(reduction="mean", loss_weight=1.0)

    sse_rows = jnp.sum((pred - label) ** 2, axis=-1)

    # mean (fused kernel, lane-dense repacked)
    loss = jax.block_until_ready(loss_mod(pred, label))
    ref = jnp.mean(sse_rows)
    assert jnp.allclose(loss, ref, rtol=1e-5, atol=1e-5), (loss, ref)
    assert not jnp.isnan(loss)

    # sum (fused kernel)
    loss_s = jax.block_until_ready(loss_mod(pred, label, reduction_override="sum"))
    assert jnp.allclose(loss_s, jnp.sum(sse_rows), rtol=1e-5, atol=1e-5), loss_s

    # none (row-loss kernel)
    loss_n = jax.block_until_ready(loss_mod(pred, label, reduction_override="none"))
    assert loss_n.shape == (B, N)
    assert jnp.allclose(loss_n, sse_rows, rtol=1e-5, atol=1e-5)

    # mean with element weights + avg_factor (row-loss kernel + weighted reduce)
    w = jax.random.uniform(k3, (B, N), dtype=jnp.float32)
    loss_w = jax.block_until_ready(loss_mod(pred, label, weight=w, avg_factor=5.0))
    ref_w = jnp.sum(sse_rows * w) / 5.0
    assert jnp.allclose(loss_w, ref_w, rtol=1e-5, atol=1e-5), (loss_w, ref_w)

    # --- 128-unaligned feature dim, multi-block + ragged-row masking paths ---
    B2, N2, D2 = 3, 10, 20
    pred2 = jax.random.normal(k4, (B2, N2, D2), dtype=jnp.float32)
    label2 = jax.random.normal(k5, (B2, N2, D2), dtype=jnp.float32)
    sse2 = jnp.sum((pred2 - label2) ** 2, axis=-1)
    loss2 = jax.block_until_ready(loss_mod(pred2, label2))
    assert jnp.allclose(loss2, jnp.mean(sse2), rtol=1e-5, atol=1e-5), loss2
    loss2_n = jax.block_until_ready(loss_mod(pred2, label2, reduction_override="none"))
    assert jnp.allclose(loss2_n, sse2, rtol=1e-5, atol=1e-5)

    # --- bf16 inputs (sublane multiple 16, in-kernel f32 accumulation) ---
    pred_bf = pred.astype(jnp.bfloat16)
    label_bf = label.astype(jnp.bfloat16)
    ref_bf = jnp.mean(jnp.sum(
        (pred_bf.astype(jnp.float32) - label_bf.astype(jnp.float32)) ** 2, axis=-1))
    loss_bf = jax.block_until_ready(loss_mod(pred_bf, label_bf))
    assert jnp.allclose(loss_bf, ref_bf, rtol=1e-5, atol=1e-5), (loss_bf, ref_bf)

    print("KERNEL_OK")
</pallas_src>

<mosaic_0001>
module attributes {stable_mosaic.version = 11 : i64} {
  func.func @_fused_sse_kernel(%arg0: i32, %arg1: memref<4x128xf32, #tpu.memory_space<vmem>>, %arg2: memref<4x128xf32, #tpu.memory_space<vmem>>, %arg3: memref<1x8x128xf32, #tpu.memory_space<vmem>>) attributes {dimension_semantics = [#tpu.dimension_semantics<parallel>], iteration_bounds = array<i64: 1>, scalar_prefetch = 0 : i64, scratch_operands = 0 : i64, tpu.core_type = #tpu.core_type<tc>, window_params = [{transform_indices = @transform_0, window_bounds = array<i64: 4, 128>}, {transform_indices = @transform_1, window_bounds = array<i64: 4, 128>}, {transform_indices = @transform_2, window_bounds = array<i64: 1, 8, 128>}]} {
    %c0 = arith.constant 0 : index
    %c0_0 = arith.constant 0 : index
    %0 = vector.load %arg1[%c0, %c0_0] : memref<4x128xf32, #tpu.memory_space<vmem>>, vector<4x128xf32>
    %c0_1 = arith.constant 0 : index
    %c0_2 = arith.constant 0 : index
    %1 = vector.load %arg2[%c0_1, %c0_2] : memref<4x128xf32, #tpu.memory_space<vmem>>, vector<4x128xf32>
    %2 = arith.subf %0, %1 : vector<4x128xf32>
    %3 = arith.mulf %2, %2 : vector<4x128xf32>
    %4 = vector.shape_cast %3 : vector<4x128xf32> to vector<1x4x128xf32>
    %cst = arith.constant dense<0.000000e+00> : vector<1xf32>
    %5 = vector.multi_reduction <add>, %4, %cst [1, 2] : vector<1x4x128xf32> to vector<1xf32>
    %6 = vector.shape_cast %5 : vector<1xf32> to vector<1x1x1xf32>
    %7 = vector.extract %6[0, 0, 0] : f32 from vector<1x1x1xf32>
    %8 = tpu.iota {dimensions = array<i32: 1>} : vector<1x8x128xi32>
    %9 = tpu.iota {dimensions = array<i32: 2>} : vector<1x8x128xi32>
    %c0_i32 = arith.constant 0 : i32
    %10 = vector.broadcast %c0_i32 : i32 to vector<1x8x128xi32>
    %11 = arith.cmpi eq, %8, %10 : vector<1x8x128xi32>
    %c0_i32_3 = arith.constant 0 : i32
    %12 = vector.broadcast %c0_i32_3 : i32 to vector<1x8x128xi32>
    %13 = arith.cmpi eq, %9, %12 : vector<1x8x128xi32>
    %14 = arith.andi %11, %13 : vector<1x8x128xi1>
    %cst_4 = arith.constant 0.000000e+00 : f32
    %15 = vector.broadcast %7 : f32 to vector<1x8x128xf32>
    %16 = vector.broadcast %cst_4 : f32 to vector<1x8x128xf32>
    %17 = arith.select %14, %15, %16 : vector<1x8x128xi1>, vector<1x8x128xf32>
    %c0_5 = arith.constant 0 : index
    %c0_6 = arith.constant 0 : index
    %c0_7 = arith.constant 0 : index
    %18 = vector.load %arg3[%c0_5, %c0_6, %c0_7] : memref<1x8x128xf32, #tpu.memory_space<vmem>>, vector<1x8x128xf32>
    tpu.vector_store %arg3[%c0_5, %c0_6, %c0_7], %17 {strides = array<i32>} : memref<1x8x128xf32, #tpu.memory_space<vmem>>, vector<1x8x128xf32>,
    return
  }
  func.func @transform_0(%arg0: i32) -> (i32, i32) {
    %c0_i32 = arith.constant 0 : i32
    %c0_i32_0 = arith.constant 0 : i32
    return %arg0, %c0_i32 : i32, i32
  }
  func.func @transform_1(%arg0: i32) -> (i32, i32) {
    %c0_i32 = arith.constant 0 : i32
    %c0_i32_0 = arith.constant 0 : i32
    return %arg0, %c0_i32 : i32, i32
  }
  func.func @transform_2(%arg0: i32) -> (i32, i32, i32) {
    %c0_i32 = arith.constant 0 : i32
    %c0_i32_0 = arith.constant 0 : i32
    %c0_i32_1 = arith.constant 0 : i32
    return %arg0, %c0_i32, %c0_i32_0 : i32, i32, i32
  }
}

</mosaic_0001>

<llo_original>
// kernel: _l2_total_sse.1
$region0: #{_l2_total_sse.1}
  #allocation0 [shape = 'u32[]', space=smem, size = 0x4, offset = 0x4, fixed_abs, tag = 'smem constant byte address 0x4 - core index']
  #allocation1 [shape = 'u32[144,128]{1,0:T(1,128)}', space=vmem, size = 0x12000, scoped, tag = 'internal scratch']
  %s0 = inlined_call_operand.hbm [shape: f32[4,128], index: 0, kind: input, shape index: {}]
  %s1 = inlined_call_operand.hbm [shape: f32[4,128], index: 1, kind: input, shape index: {}]
  %s2 = inlined_call_operand.vmem [shape: f32[1,8,128], index: 2, kind: output, shape index: {}]
  %s3 = sld [smem:[#allocation0]]
  $region26: #{_l2_total_sse.1} parent=0
    _
  %s5 = ssub.s32 1, %s3
  %s6 = scalar_select 0, %s5, %s3
  $region1: #{_l2_total_sse.1} parent=0
    #allocation2 [shape = 'u8[2048]{0}', space=vmem, size = 0x800, scoped, tag = 'input window, operand 0, single buffered']
    #allocation3 [shape = 's32[1]{0}', space=sflag, size = 0x4, scoped, tag = 'scoped memory for _l2_total_sse.1']
    #allocation4 [shape = 'u8[2048]{0}', space=vmem, size = 0x800, scoped, tag = 'input window, operand 1, single buffered']
    #allocation5 [shape = 's32[1]{0}', space=sflag, size = 0x4, scoped, tag = 'scoped memory for _l2_total_sse.1']
    %7 = vsyncpa [#allocation3], 0
    %8 = vsyncpa [#allocation5], 0
    // Predicated region
    $region2: #{_l2_total_sse.1} parent=1 // pred_check
      _
    $region3: #{_l2_total_sse.1} parent=1 // pred_check_branch
      %10 = sbr.rel (0) target = $region5
    $region4: #{_l2_total_sse.1} parent=1 // pred_region
      %s12 = ssub.s32 64, 64
      %13 = vsyncadd [#allocation3], %s12
      %s15 = sshll.u32 [#allocation2], 4
      %s16 = int_to_ptr.vmem [resolvable:$true] %s15
      %18 = dma.hbm_to_vmem [thread:$0]  %s0, 64, %s16, [#allocation3]
    $region5: #{_l2_total_sse.1} parent=1 // pred_fallthru
      _
    // Predicated region
    $region6: #{_l2_total_sse.1} parent=1 // pred_check
      _
    $region7: #{_l2_total_sse.1} parent=1 // pred_check_branch
      %20 = sbr.rel (0) target = $region9
    $region8: #{_l2_total_sse.1} parent=1 // pred_region
      %s22 = ssub.s32 64, 64
      %23 = vsyncadd [#allocation5], %s22
      %s25 = sshll.u32 [#allocation4], 4
      %s26 = int_to_ptr.vmem [resolvable:$true] %s25
      %28 = dma.hbm_to_vmem [thread:$0]  %s1, 64, %s26, [#allocation5]
    $region9: #{_l2_total_sse.1} parent=1 // pred_fallthru
      _
    // Predicated region
    $region10: #{_l2_total_sse.1} parent=1 // pred_check
      _
    $region11: #{_l2_total_sse.1} parent=1 // pred_check_branch
      %30 = sbr.rel (0) target = $region13
    $region12: #{_l2_total_sse.1} parent=1 // pred_region
      %31 = dma.done [#allocation3], 64
    $region13: #{_l2_total_sse.1} parent=1 // pred_fallthru
      _
    // Predicated region
    $region14: #{_l2_total_sse.1} parent=1 // pred_check
      _
    $region15: #{_l2_total_sse.1} parent=1 // pred_check_branch
      %33 = sbr.rel (0) target = $region17
    $region16: #{_l2_total_sse.1} parent=1 // pred_region
      %34 = dma.done [#allocation5], 64
    $region17: #{_l2_total_sse.1} parent=1 // pred_fallthru
      _
    %v35 = vld [vmem:[#allocation2] sm:$0xf]
    %v36 = vld [vmem:[#allocation4] sm:$0xf]
    %v37 = vsub.f32 %v35, %v36
    %v38 = vmul.f32 %v37, %v37
    %vm39 = vcmask 1043456
    %v40 = vsel %vm39, %v38, 0.0
    %41 = vadd.xlane.f32.xlu0 %v40
    %v42 = vpop.xlane.xlu0 %41
    %v43 = vrot.slane %v42, 4
    %v44 = vadd.f32 %v42, %v43
    %v45 = vrot.slane %v44, 2
    %v46 = vadd.f32 %v44, %v45
    %v47 = vrot.slane %v46, 1
    %v48 = vadd.f32 %v46, %v47
    %s49 = vtos %v48
    %v50 = vlaneseq
    %v51 = vshrl.u32 %v50, 7
    %v52 = vlaneseq
    %v53 = vand.u32 %v52, 127
    %vm54 = vcmp.eq.s32.totalorder %v51, 0
    %vm55 = vcmp.eq.s32.totalorder %v53, 0
    %vm56 = vmand %vm54, %vm55
    %v57 = vstv %s49
    %v58 = vsel %vm56, %v57, 0.0
    %59 = vst [vmem:[%s2] sm:$0xff] %v58
    // Predicated region
    $region18: #{_l2_total_sse.1} parent=1 // pred_check
      _
    $region19: #{_l2_total_sse.1} parent=1 // pred_check_branch
      %61 = sbr.rel (0) target = $region21
    $region20: #{_l2_total_sse.1} parent=1 // pred_region
      _
    $region21: #{_l2_total_sse.1} parent=1 // pred_fallthru
      _
    // Predicated region
    $region22: #{_l2_total_sse.1} parent=1 // pred_check
      _
    $region23: #{_l2_total_sse.1} parent=1 // pred_check_branch
      %63 = sbr.rel (0) target = $region25
    $region24: #{_l2_total_sse.1} parent=1 // pred_region
      _
    $region25: #{_l2_total_sse.1} parent=1 // pred_fallthru
      _
    %64 = vsyncpa [#allocation3], 1
    %65 = vsyncpa [#allocation5], 1

</llo_original>
